<compile_context>
chip_gen: v6e
topology: v6e:2x2x1
jax: 0.10.0
libtpu: 0.0.40
codegen_flags: <defaults>
</compile_context>

<pallas_src>
import functools

import jax
import jax.numpy as jnp
from jax import lax
from jax.experimental import pallas as pl
from jax.experimental.pallas import tpu as pltpu


def _round_up(n, m):
    return ((n + m - 1) // m) * m


def _sublane_multiple(dtype):
    # 8 for 32-bit, 16 for 16-bit, 32 for 8-bit dtypes.
    return max(8, 32 // jnp.dtype(dtype).itemsize)


def _similarity_kernel(x_ref, yhat_ref, o_ref, *, inv_temp, eps, mm_dtype):
    # x tile: [TB, H]; yhat tile: [TN, H] (already L2-normalized in wrapper).
    x = x_ref[...].astype(jnp.float32)
    sumsq = jnp.sum(x * x, axis=-1, keepdims=True)               # [TB, 1]
    # 1/max(||x||, eps) == rsqrt(max(||x||^2, eps^2)); fold 1/temp into the
    # narrow x operand so the wide [TB, TN] output needs no extra pass.
    inv_norm = inv_temp * lax.rsqrt(jnp.maximum(sumsq, eps * eps))
    x_hat = (x * inv_norm).astype(mm_dtype)                      # [TB, H]

    # Pairwise dots on the MXU: contract dim 1 of both operands (q @ k^T
    # pattern), bf16/f32 inputs with f32 accumulation.
    sims = lax.dot_general(
        x_hat, yhat_ref[...],
        dimension_numbers=(((1,), (1,)), ((), ())),
        preferred_element_type=jnp.float32)                      # [TB, TN]

    o_ref[...] = sims.astype(o_ref.dtype)


def similarity(x, y, temp, *, eps=1e-8, row_tile=256, col_tile=2048):
    """cosine_similarity(x, y, dim=-1) / temp for the SimCSE broadcast pattern.

    Accepts x of shape [B1, 1, H] (or [B1, H]) and y of shape [1, B2, H]
    (or [B2, H]); returns the [B1, B2] pairwise similarity matrix / temp.
    """
    # TODO(synk): only the pairwise [B1,1,H] x [1,B2,H] broadcast (the SimCSE
    # call pattern) is implemented; other broadcast layouts are not handled.
    if x.ndim == 3:
        assert x.shape[1] == 1, "expected x of shape [B1, 1, H]"
        x = x.reshape(x.shape[0], x.shape[2])
    if y.ndim == 3:
        assert y.shape[0] == 1, "expected y of shape [1, B2, H]"
        y = y.reshape(y.shape[1], y.shape[2])
    assert x.shape[-1] == y.shape[-1]

    b1, h = x.shape
    b2, _ = y.shape
    mm_dtype = jnp.promote_types(x.dtype, y.dtype)   # matmul / output dtype
    out_dtype = mm_dtype
    eps = float(eps)

    # --- tiling -------------------------------------------------------------
    sub = max(_sublane_multiple(x.dtype), _sublane_multiple(mm_dtype))
    # Row tile: as large as possible (256 feeds the v6e/v7x MXU), but small
    # enough to give >=2 grid steps when b1 allows, so the "parallel" axis can
    # shard across v7x's two TensorCores.
    tb = max(sub, min(row_tile, _round_up(-(-b1 // 2), sub)))
    b1p = _round_up(b1, tb)

    # Column tile: keep all of y resident when small; tile it when it would
    # crowd v7x's 64 MiB/TC VMEM (reduction-free, so still "parallel").
    tn = min(col_tile, _round_up(b2, 128))
    b2p = _round_up(b2, tn)

    n_rows = b1p // tb
    n_cols = b2p // tn

    # --- wrapper-side y normalization (done once, fused with the pad) --------
    y32 = y.astype(jnp.float32)
    y_sumsq = jnp.sum(y32 * y32, axis=-1, keepdims=True)
    y_hat = (y32 * lax.rsqrt(jnp.maximum(y_sumsq, eps * eps))).astype(mm_dtype)

    # Zero-padded rows/cols give exact zeros (zero rows -> eps clamp -> 0 dot),
    # sliced off below.
    xp = jnp.pad(x, ((0, b1p - b1), (0, 0)))
    yp = jnp.pad(y_hat, ((0, b2p - b2), (0, 0)))

    # --- specs ----------------------------------------------------------------
    x_spec = pl.BlockSpec((tb, h), lambda i, j: (i, 0))
    if n_cols == 1:
        # y block index is constant across the grid -> single-buffer it.
        y_spec = pl.BlockSpec((tn, h), lambda i, j: (j, 0),
                              pipeline_mode=pl.Buffered(1))
    else:
        y_spec = pl.BlockSpec((tn, h), lambda i, j: (j, 0))
    o_spec = pl.BlockSpec((tb, tn), lambda i, j: (i, j))

    # --- memory / cost budgeting ---------------------------------------------
    isz = lambda dt: jnp.dtype(dt).itemsize
    y_bufs = 1 if n_cols == 1 else 2
    vmem_need = (2 * tb * h * isz(x.dtype)
                 + y_bufs * tn * h * isz(mm_dtype)
                 + 2 * tb * tn * isz(out_dtype))
    vmem_limit = int(min(64 * 2**20, max(2 * vmem_need, 16 * 2**20)))

    bytes_accessed = (b1p * h * isz(x.dtype)
                      + (n_rows if n_cols > 1 else 1) * b2p * h * isz(mm_dtype)
                      + b1p * b2p * isz(out_dtype))
    cost = pl.CostEstimate(flops=2 * b1p * b2p * h,
                           transcendentals=b1p,
                           bytes_accessed=bytes_accessed)

    kernel = functools.partial(
        _similarity_kernel, inv_temp=1.0 / float(temp), eps=eps,
        mm_dtype=mm_dtype)

    out = pl.pallas_call(
        kernel,
        out_shape=jax.ShapeDtypeStruct((b1p, b2p), out_dtype),
        grid_spec=pltpu.PrefetchScalarGridSpec(
            num_scalar_prefetch=0,
            grid=(n_rows, n_cols),
            in_specs=[x_spec, y_spec],
            out_specs=o_spec,
        ),
        compiler_params=pltpu.CompilerParams(
            dimension_semantics=("parallel", "parallel"),
            vmem_limit_bytes=vmem_limit),
        cost_estimate=cost,
    )(xp, yp)

    return out[:b1, :b2]


def _reference(x, y, temp, eps=1e-8):
    # Same per-norm eps clamp as modern torch.nn.CosineSimilarity.
    dots = jnp.sum(x * y, axis=-1)
    nx = jnp.sqrt(jnp.sum(x * x, axis=-1))
    ny = jnp.sqrt(jnp.sum(y * y, axis=-1))
    return dots / (jnp.maximum(nx, eps) * jnp.maximum(ny, eps)) / temp


if __name__ == "__main__":
    # Small SimCSE-like shapes: B1=8 queries, B2=16 candidates, hidden=32.
    B1, B2, H = 8, 16, 32
    temp = 0.05

    key = jax.random.PRNGKey(0)
    kx, ky = jax.random.split(key)
    z1 = jax.random.normal(kx, (B1, H), dtype=jnp.float32)
    z2 = jax.random.normal(ky, (B2, H), dtype=jnp.float32)

    # Same call pattern as SimCSE: sim(z1.unsqueeze(1), z2.unsqueeze(0)).
    sims = similarity(z1[:, None, :], z2[None, :, :], temp)
    jax.block_until_ready(sims)

    ref = _reference(z1[:, None, :], z2[None, :, :], temp)
    assert sims.shape == (B1, B2)
    assert jnp.allclose(sims, ref, atol=1e-4, rtol=1e-4), (
        float(jnp.max(jnp.abs(sims - ref))))

    print("KERNEL_OK")
</pallas_src>

<mosaic_0001>
module attributes {stable_mosaic.version = 11 : i64} {
  func.func @_similarity_kernel(%arg0: i32, %arg1: i32, %arg2: memref<8x32xf32, #tpu.memory_space<vmem>>, %arg3: memref<128x32xf32, #tpu.memory_space<vmem>>, %arg4: memref<8x128xf32, #tpu.memory_space<vmem>>) attributes {dimension_semantics = [#tpu.dimension_semantics<parallel>, #tpu.dimension_semantics<parallel>], iteration_bounds = array<i64: 1, 1>, scalar_prefetch = 0 : i64, scratch_operands = 0 : i64, tpu.core_type = #tpu.core_type<tc>, window_params = [{transform_indices = @transform_0, window_bounds = array<i64: 8, 32>}, {pipeline_mode = #tpu.pipeline_mode<synchronous>, transform_indices = @transform_1, window_bounds = array<i64: 128, 32>}, {transform_indices = @transform_2, window_bounds = array<i64: 8, 128>}]} {
    %c0 = arith.constant 0 : index
    %c0_0 = arith.constant 0 : index
    %0 = vector.load %arg2[%c0, %c0_0] : memref<8x32xf32, #tpu.memory_space<vmem>>, vector<8x32xf32>
    %1 = arith.mulf %0, %0 : vector<8x32xf32>
    %cst = arith.constant dense<0.000000e+00> : vector<8xf32>
    %2 = vector.multi_reduction <add>, %1, %cst [1] : vector<8x32xf32> to vector<8xf32>
    %3 = vector.shape_cast %2 : vector<8xf32> to vector<8x1xf32>
    %cst_1 = arith.constant 1.000000e-16 : f32
    %4 = vector.broadcast %cst_1 : f32 to vector<8x1xf32>
    %5 = arith.maximumf %3, %4 : vector<8x1xf32>
    %6 = math.rsqrt %5 : vector<8x1xf32>
    %cst_2 = arith.constant 2.000000e+01 : f32
    %7 = vector.broadcast %cst_2 : f32 to vector<8x1xf32>
    %8 = arith.mulf %7, %6 : vector<8x1xf32>
    %9 = vector.broadcast %8 : vector<8x1xf32> to vector<8x32xf32>
    %10 = arith.mulf %0, %9 : vector<8x32xf32>
    %c0_3 = arith.constant 0 : index
    %c0_4 = arith.constant 0 : index
    %11 = vector.load %arg3[%c0_3, %c0_4] : memref<128x32xf32, #tpu.memory_space<vmem>>, vector<128x32xf32>
    %cst_5 = arith.constant dense<0.000000e+00> : vector<8x128xf32>
    %12 = tpu.matmul %10, %11, %cst_5 {dimension_numbers = #tpu.dot_dimension_numbers<[1], [1], [0], [0], [0, 0, 1, 0], [], []>} : vector<8x32xf32>, vector<128x32xf32>, vector<8x128xf32> -> vector<8x128xf32>
    %c0_6 = arith.constant 0 : index
    %c0_7 = arith.constant 0 : index
    %13 = vector.load %arg4[%c0_6, %c0_7] : memref<8x128xf32, #tpu.memory_space<vmem>>, vector<8x128xf32>
    tpu.vector_store %arg4[%c0_6, %c0_7], %12 {strides = array<i32>} : memref<8x128xf32, #tpu.memory_space<vmem>>, vector<8x128xf32>,
    return
  }
  func.func @transform_0(%arg0: i32, %arg1: i32) -> (i32, i32) {
    %c0_i32 = arith.constant 0 : i32
    %c0_i32_0 = arith.constant 0 : i32
    return %arg0, %c0_i32 : i32, i32
  }
  func.func @transform_1(%arg0: i32, %arg1: i32) -> (i32, i32) {
    %c0_i32 = arith.constant 0 : i32
    %c0_i32_0 = arith.constant 0 : i32
    return %arg1, %c0_i32 : i32, i32
  }
  func.func @transform_2(%arg0: i32, %arg1: i32) -> (i32, i32) {
    %c0_i32 = arith.constant 0 : i32
    return %arg0, %arg1 : i32, i32
  }
}

</mosaic_0001>

<llo_original>
// kernel: tpu_custom_call.1
$region0: #{tpu_custom_call.1}
  #allocation0 [shape = 'u32[]', space=smem, size = 0x4, offset = 0x4, fixed_abs, tag = 'smem constant byte address 0x4 - core index']
  #allocation1 [shape = 'u32[144,128]{1,0:T(1,128)}', space=vmem, size = 0x12000, scoped, tag = 'internal scratch']
  %s0 = inlined_call_operand.vmem [shape: f32[8,32], index: 0, kind: input, shape index: {}]
  %s1 = inlined_call_operand.vmem [shape: f32[128,32], index: 1, kind: input, shape index: {}]
  %s2 = inlined_call_operand.hbm [shape: f32[8,128], index: 2, kind: output, shape index: {}]
  %s3 = sld [smem:[#allocation0]]
  $region18: #{tpu_custom_call.1} parent=0
    _
  %s5 = ssub.s32 1, %s3
  %s6 = scalar_select 0, %s5, %s3
  $region1: #{tpu_custom_call.1} parent=0
    #allocation2 [shape = 'u8[4096]{0}', space=vmem, size = 0x1000, scoped, tag = 'output window, operand 0, single buffered']
    #allocation3 [shape = 's32[1]{0}', space=sflag, size = 0x4, scoped, tag = 'scoped memory for tpu_custom_call.1']
    %7 = vsyncpa [#allocation3], 0
    // Predicated region
    $region2: #{tpu_custom_call.1} parent=1 // pred_check
      _
    $region3: #{tpu_custom_call.1} parent=1 // pred_check_branch
      %9 = sbr.rel (0) target = $region5
    $region4: #{tpu_custom_call.1} parent=1 // pred_region
      _
    $region5: #{tpu_custom_call.1} parent=1 // pred_fallthru
      _
    // Predicated region
    $region6: #{tpu_custom_call.1} parent=1 // pred_check
      _
    $region7: #{tpu_custom_call.1} parent=1 // pred_check_branch
      %11 = sbr.rel (0) target = $region9
    $region8: #{tpu_custom_call.1} parent=1 // pred_region
      _
    $region9: #{tpu_custom_call.1} parent=1 // pred_fallthru
      _
    %v12 = vld [vmem:[%s0] sm:$0xff]
    %v13 = vmul.f32 %v12, %v12
    %vm14 = vcmask 261120
    %v15 = vsel %vm14, %v13, 0.0
    %16 = vadd.xlane.f32.xlu0 %v15
    %v17 = vpop.xlane.xlu0 %16
    %v18 = vmax.f32 %v17, 1e-16
    %v19 = vrsqrt.pop %v18
    %v20 = vmul.f32 %v19, 20.0
    %v21 = vmul.f32 %v12, %v20
    %v22 = vld [vmem:[%s1] sm:$0xff]
    %v23 = vld [vmem:[%s1 + $0x8] sm:$0xff]
    %v24 = vld [vmem:[%s1 + $0x10] sm:$0xff]
    %v25 = vld [vmem:[%s1 + $0x18] sm:$0xff]
    %v26 = vld [vmem:[%s1 + $0x20] sm:$0xff]
    %v27 = vld [vmem:[%s1 + $0x28] sm:$0xff]
    %v28 = vld [vmem:[%s1 + $0x30] sm:$0xff]
    %v29 = vld [vmem:[%s1 + $0x38] sm:$0xff]
    %v30 = vld [vmem:[%s1 + $0x40] sm:$0xff]
    %v31 = vld [vmem:[%s1 + $0x48] sm:$0xff]
    %v32 = vld [vmem:[%s1 + $0x50] sm:$0xff]
    %v33 = vld [vmem:[%s1 + $0x58] sm:$0xff]
    %v34 = vld [vmem:[%s1 + $0x60] sm:$0xff]
    %v35 = vld [vmem:[%s1 + $0x68] sm:$0xff]
    %v36 = vld [vmem:[%s1 + $0x70] sm:$0xff]
    %v37 = vld [vmem:[%s1 + $0x78] sm:$0xff]
    %v39 = vsel %vm14, %v21, 0
    %v42 = vsel %vm14, %v22, 0
    %v45 = vsel %vm14, %v23, 0
    %v48 = vsel %vm14, %v24, 0
    %v51 = vsel %vm14, %v25, 0
    %v54 = vsel %vm14, %v26, 0
    %v57 = vsel %vm14, %v27, 0
    %v60 = vsel %vm14, %v28, 0
    %v63 = vsel %vm14, %v29, 0
    %v66 = vsel %vm14, %v30, 0
    %v69 = vsel %vm14, %v31, 0
    %v72 = vsel %vm14, %v32, 0
    %v75 = vsel %vm14, %v33, 0
    %v78 = vsel %vm14, %v34, 0
    %v81 = vsel %vm14, %v35, 0
    %v84 = vsel %vm14, %v36, 0
    %v87 = vsel %vm14, %v37, 0
    %89 = vmatprep.subr.mxu0 0.0
    %90 = vmatpush1.xpose.msra.mxu0 %v87
    %91 = vmatprep.subr.mxu0 0.0
    %92 = vmatpush1.xpose.msra.mxu0 %v84
    %93 = vmatprep.subr.mxu0 0.0
    %94 = vmatpush1.xpose.msra.mxu0 %v81
    %95 = vmatprep.subr.mxu0 0.0
    %96 = vmatpush1.xpose.msra.mxu0 %v78
    %97 = vmatprep.subr.mxu0 0.0
    %98 = vmatpush1.xpose.msra.mxu0 %v75
    %99 = vmatprep.subr.mxu0 0.0
    %100 = vmatpush1.xpose.msra.mxu0 %v72
    %101 = vmatprep.subr.mxu0 0.0
    %102 = vmatpush1.xpose.msra.mxu0 %v69
    %103 = vmatprep.subr.mxu0 0.0
    %104 = vmatpush1.xpose.msra.mxu0 %v66
    %105 = vmatprep.subr.mxu0 0.0
    %106 = vmatpush1.xpose.msra.mxu0 %v63
    %107 = vmatprep.subr.mxu0 0.0
    %108 = vmatpush1.xpose.msra.mxu0 %v60
    %109 = vmatprep.subr.mxu0 0.0
    %110 = vmatpush1.xpose.msra.mxu0 %v57
    %111 = vmatprep.subr.mxu0 0.0
    %112 = vmatpush1.xpose.msra.mxu0 %v54
    %113 = vmatprep.subr.mxu0 0.0
    %114 = vmatpush1.xpose.msra.mxu0 %v51
    %115 = vmatprep.subr.mxu0 0.0
    %116 = vmatpush1.xpose.msra.mxu0 %v48
    %117 = vmatprep.subr.mxu0 0.0
    %118 = vmatpush1.xpose.msra.mxu0 %v45
    %119 = vmatprep.subr.mxu0 0.0
    %120 = vmatpush1.xpose.msra.mxu0 %v42
    %121 = vmatprep.subr.mxu0 0.0
    %122 = vmatpush2.xpose.msra.mxu0 0.0
    %123 = vmatprep.subr.mxu0 0.0
    %124 = vmatpush2.xpose.msra.mxu0 0.0
    %125 = vmatprep.subr.mxu0 0.0
    %126 = vmatpush2.xpose.msra.mxu0 0.0
    %127 = vmatprep.subr.mxu0 0.0
    %128 = vmatpush2.xpose.msra.mxu0 0.0
    %129 = vmatprep.subr.mxu0 0.0
    %130 = vmatpush2.xpose.msra.mxu0 0.0
    %131 = vmatprep.subr.mxu0 0.0
    %132 = vmatpush2.xpose.msra.mxu0 0.0
    %133 = vmatprep.subr.mxu0 0.0
    %134 = vmatpush2.xpose.msra.mxu0 0.0
    %135 = vmatprep.subr.mxu0 0.0
    %136 = vmatpush2.xpose.msra.mxu0 0.0
    %137 = vmatprep.subr.mxu0 0.0
    %138 = vmatpush2.xpose.msra.mxu0 0.0
    %139 = vmatprep.subr.mxu0 0.0
    %140 = vmatpush2.xpose.msra.mxu0 0.0
    %141 = vmatprep.subr.mxu0 0.0
    %142 = vmatpush2.xpose.msra.mxu0 0.0
    %143 = vmatprep.subr.mxu0 0.0
    %144 = vmatpush2.xpose.msra.mxu0 0.0
    %145 = vmatprep.subr.mxu0 0.0
    %146 = vmatpush2.xpose.msra.mxu0 0.0
    %147 = vmatprep.subr.mxu0 0.0
    %148 = vmatpush2.xpose.msra.mxu0 0.0
    %149 = vmatprep.subr.mxu0 0.0
    %150 = vmatpush2.xpose.msra.mxu0 0.0
    %151 = vmatprep.subr.mxu0 0.0
    %152 = vmatpush2.xpose.msra.mxu0 0.0
    %153 = vmatprep.mubr.f32.mxu0 0.0
    %154 = vmatmul.mubr.f32.gmra.mxu0 %v39
    %v155 = vpop.f32.mrf.mxu0
    %v156 = vadd.f32 0.0, %v155
    %v157 = vpop.f32.mrf.mxu0
    %158 = vdwg.mxu0
    %159 = vst [vmem:[#allocation2] sm:$0xff] %v156
    // Predicated region
    $region10: #{tpu_custom_call.1} parent=1 // pred_check
      _
    $region11: #{tpu_custom_call.1} parent=1 // pred_check_branch
      %161 = sbr.rel (0) target = $region13
    $region12: #{tpu_custom_call.1} parent=1 // pred_region
      %s163 = ssub.s32 128, 128
      %164 = vsyncadd [#allocation3], %s163
      %s166 = sshll.u32 [#allocation2], 4
      %s167 = int_to_ptr.vmem [resolvable:$true] %s166
      %169 = dma.vmem_to_hbm [thread:$0]  %s167, 128, %s2, [#allocation3]
    $region13: #{tpu_custom_call.1} parent=1 // pred_fallthru
      _
    // Predicated region
    $region14: #{tpu_custom_call.1} parent=1 // pred_check
      _
    $region15: #{tpu_custom_call.1} parent=1 // pred_check_branch
      %171 = sbr.rel (0) target = $region17
    $region16: #{tpu_custom_call.1} parent=1 // pred_region
      %172 = dma.done [#allocation3], 128
    $region17: #{tpu_custom_call.1} parent=1 // pred_fallthru
      _
    %173 = vsyncpa [#allocation3], 1

</llo_original>
